<compile_context>
chip_gen: v7x
topology: tpu7x:2x2x1
jax: 0.10.0
libtpu: 0.0.40
codegen_flags: <defaults>
</compile_context>

<pallas_src>
import math

import jax
import jax.numpy as jnp
from jax.experimental import pallas as pl
from jax.experimental.pallas import tpu as pltpu


NEG_SLOPE = 0.01  # PyTorch nn.LeakyReLU default negative_slope


def _inverse_model_kernel(s_ref, ns_ref, w1a_ref, w1b_ref, b1_ref,
                          w2_ref, b2_ref, o_ref):
    cdt = w1a_ref.dtype  # compute dtype baked into the prepared weights
    # In-kernel cast of the streamed activations (no-op when cdt == input dtype).
    s = s_ref[...].astype(cdt)
    ns = ns_ref[...].astype(cdt)
    # First Linear with the concat folded away:
    #   [s, ns] @ W1^T + b1  ==  s @ W1a + ns @ W1b + b1
    # Two MXU dots accumulate in f32; no cross-lane shuffle / extra copy.
    h = jnp.dot(s, w1a_ref[...], preferred_element_type=jnp.float32)
    h = h + jnp.dot(ns, w1b_ref[...], preferred_element_type=jnp.float32)
    h = h + b1_ref[...]                      # f32 bias add
    # LeakyReLU(0.01): identical to where(h>0, h, 0.01*h) for slope in (0,1).
    h = jnp.maximum(h, NEG_SLOPE * h)
    # Output head: narrow [tb, action_dim] result, f32 accumulate + bias, narrow store.
    y = jnp.dot(h.astype(cdt), w2_ref[...], preferred_element_type=jnp.float32)
    o_ref[...] = (y + b2_ref[...]).astype(o_ref.dtype)


def _round_up(x, m):
    return ((x + m - 1) // m) * m


def prepare_inverse_model_params(w1, b1, w2, b2, compute_dtype=jnp.bfloat16):
    """One-time parameter prep (layout only, no compute hoisting).

    w1 : [hidden, 2*latent]   b1 : [hidden]        (torch nn.Linear layout)
    w2 : [action_dim, hidden] b2 : [action_dim]
    """
    latent = w1.shape[1] // 2
    w1a = jnp.asarray(w1[:, :latent].T, compute_dtype)   # [latent, hidden]
    w1b = jnp.asarray(w1[:, latent:].T, compute_dtype)   # [latent, hidden]
    b1_2d = jnp.asarray(b1, jnp.float32)[None, :]        # [1, hidden]
    w2_t = jnp.asarray(w2.T, compute_dtype)               # [hidden, action_dim]
    b2_2d = jnp.asarray(b2, jnp.float32)[None, :]        # [1, action_dim]
    return (w1a, w1b, b1_2d, w2_t, b2_2d)


def _pick_tile(B, block_b):
    """8-aligned batch tile; >= 2 tiles when possible so v7x's two TCs both work."""
    if B < 16:
        return B  # single tile equal to the full batch dim (satisfies (8,128) rule)
    return max(8, min(_round_up(block_b, 8), _round_up(pl.cdiv(B, 2), 8)))


def inverse_model_forward(state, next_state, params, *, block_b=4096):
    """InverseModel forward.

    state, next_state : [B, latent] (passed to the kernel as-is; cast in-kernel)
    params            : output of prepare_inverse_model_params()
    Returns [B, action_dim] float32.
    """
    w1a, w1b, b1_2d, w2_t, b2_2d = params
    B, latent = state.shape
    action_dim = w2_t.shape[1]

    tb = _pick_tile(B, block_b)
    grid = (pl.cdiv(B, tb),)   # ragged last block handled by Pallas masking

    def resident(a):
        return pl.BlockSpec(a.shape, lambda i: (0,) * a.ndim)

    return pl.pallas_call(
        _inverse_model_kernel,
        out_shape=jax.ShapeDtypeStruct((B, action_dim), jnp.float32),
        grid=grid,
        in_specs=[
            pl.BlockSpec((tb, latent), lambda i: (i, 0)),   # state tile (streamed)
            pl.BlockSpec((tb, latent), lambda i: (i, 0)),   # next_state tile
            resident(w1a), resident(w1b), resident(b1_2d),
            resident(w2_t), resident(b2_2d),
        ],
        # Narrow output: last dim equals the full array dim -> valid block,
        # HBM writeback is action_dim*4 bytes/row instead of a 128-lane slab.
        out_specs=pl.BlockSpec((tb, action_dim), lambda i: (i, 0)),
        compiler_params=pltpu.CompilerParams(
            dimension_semantics=("parallel",),     # shard batch tiles on v7x's 2 TCs
            vmem_limit_bytes=32 * 1024 * 1024,
        ),
    )(state, next_state, w1a, w1b, b1_2d, w2_t, b2_2d)


def xavier_uniform(key, fan_out, fan_in, dtype=jnp.float32):
    """Matches nn.init.xavier_uniform_ on a torch Linear weight of shape [out, in]."""
    bound = math.sqrt(6.0 / (fan_in + fan_out))
    return jax.random.uniform(key, (fan_out, fan_in), dtype, -bound, bound)


def linear_bias_init(key, fan_in, fan_out, dtype=jnp.float32):
    """Matches torch.nn.Linear default bias init: U(-1/sqrt(fan_in), 1/sqrt(fan_in))."""
    bound = 1.0 / math.sqrt(fan_in)
    return jax.random.uniform(key, (fan_out,), dtype, -bound, bound)


if __name__ == "__main__":
    latent_dim, action_dim, hidden_dim = 16, 4, 32
    batch = 2

    key = jax.random.PRNGKey(0)
    k_s, k_ns, k_w1, k_b1, k_w2, k_b2, k_s2, k_ns2 = jax.random.split(key, 8)

    state = jax.random.normal(k_s, (batch, latent_dim), jnp.float32)
    next_state = jax.random.normal(k_ns, (batch, latent_dim), jnp.float32)

    # Parameters (xavier-uniform weights like the module's __init__, torch layouts).
    w1 = xavier_uniform(k_w1, hidden_dim, 2 * latent_dim)        # [hidden, 2*latent]
    b1 = linear_bias_init(k_b1, 2 * latent_dim, hidden_dim)      # [hidden]
    w2 = xavier_uniform(k_w2, action_dim, hidden_dim)            # [action, hidden]
    b2 = linear_bias_init(k_b2, hidden_dim, action_dim)          # [action]

    def torch_ref_f32(s, ns):
        x = jnp.concatenate([s, ns], axis=-1)
        h = jnp.dot(x, w1.T, precision=jax.lax.Precision.HIGHEST) + b1
        h = jnp.where(h > 0, h, NEG_SLOPE * h)
        return jnp.dot(h, w2.T, precision=jax.lax.Precision.HIGHEST) + b2

    def bf16_matched_ref(s, ns):
        sb, nsb = s.astype(jnp.bfloat16), ns.astype(jnp.bfloat16)
        w1c, w2c = w1.astype(jnp.bfloat16), w2.astype(jnp.bfloat16)
        h = (jnp.dot(sb, w1c[:, :latent_dim].T, preferred_element_type=jnp.float32)
             + jnp.dot(nsb, w1c[:, latent_dim:].T, preferred_element_type=jnp.float32)
             + b1)
        h = jnp.maximum(h, NEG_SLOPE * h)
        return jnp.dot(h.astype(jnp.bfloat16), w2c.T,
                       preferred_element_type=jnp.float32) + b2

    # --- default bf16 compute path, single tile (batch=2) ---
    params_bf16 = prepare_inverse_model_params(w1, b1, w2, b2, jnp.bfloat16)
    out = jax.block_until_ready(inverse_model_forward(state, next_state, params_bf16))
    assert out.shape == (batch, action_dim)
    assert jnp.allclose(out, bf16_matched_ref(state, next_state), atol=2e-3, rtol=2e-3)
    assert jnp.allclose(out, torch_ref_f32(state, next_state), atol=1e-1, rtol=1e-1)

    # --- multi-tile + ragged-last-block path (exercises grid masking, 2 TC split) ---
    state2 = jax.random.normal(k_s2, (40, latent_dim), jnp.float32)
    next_state2 = jax.random.normal(k_ns2, (40, latent_dim), jnp.float32)
    out2 = jax.block_until_ready(
        inverse_model_forward(state2, next_state2, params_bf16, block_b=16))
    assert out2.shape == (40, action_dim)
    assert jnp.allclose(out2, bf16_matched_ref(state2, next_state2), atol=2e-3, rtol=2e-3)

    # --- f32 compute path (closer parity to the torch f32 forward; free when mem-bound) ---
    params_f32 = prepare_inverse_model_params(w1, b1, w2, b2, jnp.float32)
    out3 = jax.block_until_ready(inverse_model_forward(state, next_state, params_f32))
    assert jnp.allclose(out3, torch_ref_f32(state, next_state), atol=5e-2, rtol=5e-2)

    print("KERNEL_OK")
</pallas_src>

<mosaic_0001>
module attributes {stable_mosaic.version = 11 : i64} {
  func.func @_inverse_model_kernel(%arg0: i32, %arg1: memref<2x16xf32, #tpu.memory_space<vmem>>, %arg2: memref<2x16xf32, #tpu.memory_space<vmem>>, %arg3: memref<16x32xbf16, #tpu.memory_space<vmem>>, %arg4: memref<16x32xbf16, #tpu.memory_space<vmem>>, %arg5: memref<1x32xf32, #tpu.memory_space<vmem>>, %arg6: memref<32x4xbf16, #tpu.memory_space<vmem>>, %arg7: memref<1x4xf32, #tpu.memory_space<vmem>>, %arg8: memref<2x4xf32, #tpu.memory_space<vmem>>) attributes {dimension_semantics = [#tpu.dimension_semantics<parallel>], iteration_bounds = array<i64: 1>, scalar_prefetch = 0 : i64, scratch_operands = 0 : i64, tpu.core_type = #tpu.core_type<tc>, window_params = [{transform_indices = @transform_0, window_bounds = array<i64: 2, 16>}, {transform_indices = @transform_1, window_bounds = array<i64: 2, 16>}, {pipeline_mode = #tpu.pipeline_mode<synchronous>, transform_indices = @transform_2, window_bounds = array<i64: 16, 32>}, {pipeline_mode = #tpu.pipeline_mode<synchronous>, transform_indices = @transform_3, window_bounds = array<i64: 16, 32>}, {pipeline_mode = #tpu.pipeline_mode<synchronous>, transform_indices = @transform_4, window_bounds = array<i64: 1, 32>}, {pipeline_mode = #tpu.pipeline_mode<synchronous>, transform_indices = @transform_5, window_bounds = array<i64: 32, 4>}, {pipeline_mode = #tpu.pipeline_mode<synchronous>, transform_indices = @transform_6, window_bounds = array<i64: 1, 4>}, {transform_indices = @transform_7, window_bounds = array<i64: 2, 4>}]} {
    %c0 = arith.constant 0 : index
    %c0_0 = arith.constant 0 : index
    %0 = vector.load %arg1[%c0, %c0_0] : memref<2x16xf32, #tpu.memory_space<vmem>>, vector<2x16xf32>
    %1 = arith.truncf %0 : vector<2x16xf32> to vector<2x16xbf16>
    %c0_1 = arith.constant 0 : index
    %c0_2 = arith.constant 0 : index
    %2 = vector.load %arg2[%c0_1, %c0_2] : memref<2x16xf32, #tpu.memory_space<vmem>>, vector<2x16xf32>
    %3 = arith.truncf %2 : vector<2x16xf32> to vector<2x16xbf16>
    %c0_3 = arith.constant 0 : index
    %c0_4 = arith.constant 0 : index
    %4 = vector.load %arg3[%c0_3, %c0_4] : memref<16x32xbf16, #tpu.memory_space<vmem>>, vector<16x32xbf16>
    %cst = arith.constant dense<0.000000e+00> : vector<2x32xf32>
    %5 = tpu.matmul %1, %4, %cst {dimension_numbers = #tpu.dot_dimension_numbers<[1], [0], [0], [1], [0, 0, 1, 1], [], []>} : vector<2x16xbf16>, vector<16x32xbf16>, vector<2x32xf32> -> vector<2x32xf32>
    %c0_5 = arith.constant 0 : index
    %c0_6 = arith.constant 0 : index
    %6 = vector.load %arg4[%c0_5, %c0_6] : memref<16x32xbf16, #tpu.memory_space<vmem>>, vector<16x32xbf16>
    %cst_7 = arith.constant dense<0.000000e+00> : vector<2x32xf32>
    %7 = tpu.matmul %3, %6, %cst_7 {dimension_numbers = #tpu.dot_dimension_numbers<[1], [0], [0], [1], [0, 0, 1, 1], [], []>} : vector<2x16xbf16>, vector<16x32xbf16>, vector<2x32xf32> -> vector<2x32xf32>
    %8 = arith.addf %5, %7 : vector<2x32xf32>
    %c0_8 = arith.constant 0 : index
    %c0_9 = arith.constant 0 : index
    %9 = vector.load %arg5[%c0_8, %c0_9] : memref<1x32xf32, #tpu.memory_space<vmem>>, vector<1x32xf32>
    %10 = vector.broadcast %9 : vector<1x32xf32> to vector<2x32xf32>
    %11 = arith.addf %8, %10 : vector<2x32xf32>
    %cst_10 = arith.constant 0.00999999977 : f32
    %12 = vector.broadcast %cst_10 : f32 to vector<2x32xf32>
    %13 = arith.mulf %12, %11 : vector<2x32xf32>
    %14 = arith.maximumf %11, %13 : vector<2x32xf32>
    %15 = arith.truncf %14 : vector<2x32xf32> to vector<2x32xbf16>
    %c0_11 = arith.constant 0 : index
    %c0_12 = arith.constant 0 : index
    %16 = vector.load %arg6[%c0_11, %c0_12] : memref<32x4xbf16, #tpu.memory_space<vmem>>, vector<32x4xbf16>
    %cst_13 = arith.constant dense<0.000000e+00> : vector<2x4xf32>
    %17 = tpu.matmul %15, %16, %cst_13 {dimension_numbers = #tpu.dot_dimension_numbers<[1], [0], [0], [1], [0, 0, 1, 1], [], []>} : vector<2x32xbf16>, vector<32x4xbf16>, vector<2x4xf32> -> vector<2x4xf32>
    %c0_14 = arith.constant 0 : index
    %c0_15 = arith.constant 0 : index
    %18 = vector.load %arg7[%c0_14, %c0_15] : memref<1x4xf32, #tpu.memory_space<vmem>>, vector<1x4xf32>
    %19 = vector.broadcast %18 : vector<1x4xf32> to vector<2x4xf32>
    %20 = arith.addf %17, %19 : vector<2x4xf32>
    %c0_16 = arith.constant 0 : index
    %c0_17 = arith.constant 0 : index
    %21 = vector.load %arg8[%c0_16, %c0_17] : memref<2x4xf32, #tpu.memory_space<vmem>>, vector<2x4xf32>
    tpu.vector_store %arg8[%c0_16, %c0_17], %20 {strides = array<i32>} : memref<2x4xf32, #tpu.memory_space<vmem>>, vector<2x4xf32>,
    return
  }
  func.func @transform_0(%arg0: i32) -> (i32, i32) {
    %c0_i32 = arith.constant 0 : i32
    %c0_i32_0 = arith.constant 0 : i32
    return %arg0, %c0_i32 : i32, i32
  }
  func.func @transform_1(%arg0: i32) -> (i32, i32) {
    %c0_i32 = arith.constant 0 : i32
    %c0_i32_0 = arith.constant 0 : i32
    return %arg0, %c0_i32 : i32, i32
  }
  func.func @transform_2(%arg0: i32) -> (i32, i32) {
    %c0_i32 = arith.constant 0 : i32
    %c0_i32_0 = arith.constant 0 : i32
    %c0_i32_1 = arith.constant 0 : i32
    return %c0_i32, %c0_i32_0 : i32, i32
  }
  func.func @transform_3(%arg0: i32) -> (i32, i32) {
    %c0_i32 = arith.constant 0 : i32
    %c0_i32_0 = arith.constant 0 : i32
    %c0_i32_1 = arith.constant 0 : i32
    return %c0_i32, %c0_i32_0 : i32, i32
  }
  func.func @transform_4(%arg0: i32) -> (i32, i32) {
    %c0_i32 = arith.constant 0 : i32
    %c0_i32_0 = arith.constant 0 : i32
    %c0_i32_1 = arith.constant 0 : i32
    return %c0_i32, %c0_i32_0 : i32, i32
  }
  func.func @transform_5(%arg0: i32) -> (i32, i32) {
    %c0_i32 = arith.constant 0 : i32
    %c0_i32_0 = arith.constant 0 : i32
    %c0_i32_1 = arith.constant 0 : i32
    return %c0_i32, %c0_i32_0 : i32, i32
  }
  func.func @transform_6(%arg0: i32) -> (i32, i32) {
    %c0_i32 = arith.constant 0 : i32
    %c0_i32_0 = arith.constant 0 : i32
    %c0_i32_1 = arith.constant 0 : i32
    return %c0_i32, %c0_i32_0 : i32, i32
  }
  func.func @transform_7(%arg0: i32) -> (i32, i32) {
    %c0_i32 = arith.constant 0 : i32
    %c0_i32_0 = arith.constant 0 : i32
    return %arg0, %c0_i32 : i32, i32
  }
}

</mosaic_0001>

<llo_original>
// kernel: tpu_custom_call.1
$region0: #{tpu_custom_call.1}
  #allocation0 [shape = 'u32[]', space=smem, size = 0x4, offset = 0x4, fixed_abs, tag = 'smem constant byte address 0x4 - core index']
  #allocation1 [shape = 'u32[144,128]{1,0:T(1,128)}', space=vmem, size = 0x12000, scoped, tag = 'internal scratch']
  %s0 = inlined_call_operand.vmem [shape: f32[2,16], index: 0, kind: input, shape index: {}]
  %s1 = inlined_call_operand.hbm [shape: f32[2,16], index: 1, kind: input, shape index: {}]
  %s2 = inlined_call_operand.vmem [shape: bf16[16,32], index: 2, kind: input, shape index: {}]
  %s3 = inlined_call_operand.vmem [shape: bf16[16,32], index: 3, kind: input, shape index: {}]
  %s4 = inlined_call_operand.vmem [shape: f32[1,32], index: 4, kind: input, shape index: {}]
  %s5 = inlined_call_operand.vmem [shape: bf16[32,4], index: 5, kind: input, shape index: {}]
  %s6 = inlined_call_operand.vmem [shape: f32[1,4], index: 6, kind: input, shape index: {}]
  %s7 = inlined_call_operand.hbm [shape: f32[2,4], index: 7, kind: output, shape index: {}]
  %s8 = sld [smem:[#allocation0]]
  $region42: #{tpu_custom_call.1} parent=0
    _
  %s10 = ssub.s32 1, %s8
  %s11 = scalar_select 0, %s10, %s8
  $region1: #{tpu_custom_call.1} parent=0
    #allocation2 [shape = 'u8[1024]{0}', space=vmem, size = 0x400, scoped, tag = 'input window, operand 1, single buffered']
    #allocation3 [shape = 's32[1]{0}', space=sflag, size = 0x4, scoped, tag = 'scoped memory for tpu_custom_call.1']
    #allocation4 [shape = 's32[1]{0}', space=sflag, size = 0x4, scoped, tag = 'scoped memory for tpu_custom_call.1']
    #allocation5 [shape = 'u8[1024]{0}', space=vmem, size = 0x400, scoped, tag = 'output window, operand 0, single buffered']
    %12 = vsyncpa [#allocation3], 0
    %13 = vsyncpa [#allocation4], 0
    // Predicated region
    $region2: #{tpu_custom_call.1} parent=1 // pred_check
      _
    $region3: #{tpu_custom_call.1} parent=1 // pred_check_branch
      %15 = sbr.rel (0) target = $region5
    $region4: #{tpu_custom_call.1} parent=1 // pred_region
      _
    $region5: #{tpu_custom_call.1} parent=1 // pred_fallthru
      _
    // Predicated region
    $region6: #{tpu_custom_call.1} parent=1 // pred_check
      _
    $region7: #{tpu_custom_call.1} parent=1 // pred_check_branch
      %17 = sbr.rel (0) target = $region9
    $region8: #{tpu_custom_call.1} parent=1 // pred_region
      %s19 = ssub.s32 32, 32
      %20 = vsyncadd [#allocation3], %s19
      %s22 = sshll.u32 [#allocation2], 4
      %s23 = int_to_ptr.vmem [resolvable:$true] %s22
      %25 = dma.hbm_to_vmem [thread:$0]  %s1, 32, %s23, [#allocation3]
    $region9: #{tpu_custom_call.1} parent=1 // pred_fallthru
      _
    // Predicated region
    $region10: #{tpu_custom_call.1} parent=1 // pred_check
      _
    $region11: #{tpu_custom_call.1} parent=1 // pred_check_branch
      %27 = sbr.rel (0) target = $region13
    $region12: #{tpu_custom_call.1} parent=1 // pred_region
      _
    $region13: #{tpu_custom_call.1} parent=1 // pred_fallthru
      _
    // Predicated region
    $region14: #{tpu_custom_call.1} parent=1 // pred_check
      _
    $region15: #{tpu_custom_call.1} parent=1 // pred_check_branch
      %29 = sbr.rel (0) target = $region17
    $region16: #{tpu_custom_call.1} parent=1 // pred_region
      _
    $region17: #{tpu_custom_call.1} parent=1 // pred_fallthru
      _
    // Predicated region
    $region18: #{tpu_custom_call.1} parent=1 // pred_check
      _
    $region19: #{tpu_custom_call.1} parent=1 // pred_check_branch
      %31 = sbr.rel (0) target = $region21
    $region20: #{tpu_custom_call.1} parent=1 // pred_region
      _
    $region21: #{tpu_custom_call.1} parent=1 // pred_fallthru
      _
    // Predicated region
    $region22: #{tpu_custom_call.1} parent=1 // pred_check
      _
    $region23: #{tpu_custom_call.1} parent=1 // pred_check_branch
      %33 = sbr.rel (0) target = $region25
    $region24: #{tpu_custom_call.1} parent=1 // pred_region
      _
    $region25: #{tpu_custom_call.1} parent=1 // pred_fallthru
      _
    // Predicated region
    $region26: #{tpu_custom_call.1} parent=1 // pred_check
      _
    $region27: #{tpu_custom_call.1} parent=1 // pred_check_branch
      %35 = sbr.rel (0) target = $region29
    $region28: #{tpu_custom_call.1} parent=1 // pred_region
      _
    $region29: #{tpu_custom_call.1} parent=1 // pred_fallthru
      _
    // Predicated region
    $region30: #{tpu_custom_call.1} parent=1 // pred_check
      _
    $region31: #{tpu_custom_call.1} parent=1 // pred_check_branch
      %37 = sbr.rel (0) target = $region33
    $region32: #{tpu_custom_call.1} parent=1 // pred_region
      %38 = dma.done [#allocation3], 32
    $region33: #{tpu_custom_call.1} parent=1 // pred_fallthru
      _
    %v40 = vld [vmem:[%s0] sm:$0x3]
    %v41 = vpack.c.bf16 %v40, %v40
    %v42 = vld [vmem:[#allocation2] sm:$0x3]
    %v43 = vpack.c.bf16 %v42, %v42
    %v44 = vld [vmem:[%s2] sm:$0xf]
    %v45 = vld [vmem:[%s2 + $0x4] sm:$0xf]
    %v46 = vld [vmem:[%s3] sm:$0xf]
    %v47 = vld [vmem:[%s3 + $0x4] sm:$0xf]
    %v50 = vunpack.c.l.b16 %v46
    %v51 = vunpack.c.l.b16 %v47
    %v52 = vpack.c.b16 %v51, %v50
    %vm54 = vcmask 130048
    %v56 = vsel %vm54, %v43, 0
    %58 = vmatprep.subr.bf16.mxu0 0
    %59 = vmatpush1.bf16.msra.mxu0 %v52
    %60 = vmatprep.subr.bf16.mxu0 0
    %61 = vmatpush1.bf16.msra.mxu0 0
    %62 = vmatprep.subr.bf16.mxu0 0
    %63 = vmatpush1.bf16.msra.mxu0 0
    %64 = vmatprep.subr.bf16.mxu0 0
    %65 = vmatpush1.bf16.msra.mxu0 0
    %66 = vmatprep.subr.bf16.mxu0 0
    %67 = vmatpush1.bf16.msra.mxu0 0
    %68 = vmatprep.subr.bf16.mxu0 0
    %69 = vmatpush1.bf16.msra.mxu0 0
    %70 = vmatprep.subr.bf16.mxu0 0
    %71 = vmatpush1.bf16.msra.mxu0 0
    %72 = vmatprep.subr.bf16.mxu0 0
    %73 = vmatpush1.bf16.msra.mxu0 0
    %74 = vmatprep.subr.bf16.mxu0 0
    %75 = vmatpush1.bf16.msra.mxu0 0
    %76 = vmatprep.subr.bf16.mxu0 0
    %77 = vmatpush1.bf16.msra.mxu0 0
    %78 = vmatprep.subr.bf16.mxu0 0
    %79 = vmatpush1.bf16.msra.mxu0 0
    %80 = vmatprep.subr.bf16.mxu0 0
    %81 = vmatpush1.bf16.msra.mxu0 0
    %82 = vmatprep.subr.bf16.mxu0 0
    %83 = vmatpush1.bf16.msra.mxu0 0
    %84 = vmatprep.subr.bf16.mxu0 0
    %85 = vmatpush1.bf16.msra.mxu0 0
    %86 = vmatprep.subr.bf16.mxu0 0
    %87 = vmatpush1.bf16.msra.mxu0 0
    %88 = vmatprep.subr.bf16.mxu0 0
    %89 = vmatpush1.bf16.msra.mxu0 0
    %90 = vmatprep.mubr.bf16.mxu0 0
    %91 = vmatmul.mubr.bf16.gmra.mrb[0].mxu0 %v56
    %v92 = vpop.f32.mrb[0].mxu0
    %v93 = vadd.f32 0.0, %v92
    %v94 = vpop.f32.mrb[0].mxu0
    %v95 = vpop.f32.mrb[0].mxu0
    %v96 = vpop.f32.mrb[0].mxu0
    %97 = vdwg.mxu0
    %v100 = vunpack.c.l.b16 %v44
    %v101 = vunpack.c.l.b16 %v45
    %v102 = vpack.c.b16 %v101, %v100
    %v105 = vsel %vm54, %v41, 0
    %107 = vmatprep.subr.bf16.mxu0 0
    %108 = vmatpush1.bf16.msra.mxu0 %v102
    %109 = vmatprep.subr.bf16.mxu0 0
    %110 = vmatpush1.bf16.msra.mxu0 0
    %111 = vmatprep.subr.bf16.mxu0 0
    %112 = vmatpush1.bf16.msra.mxu0 0
    %113 = vmatprep.subr.bf16.mxu0 0
    %114 = vmatpush1.bf16.msra.mxu0 0
    %115 = vmatprep.subr.bf16.mxu0 0
    %116 = vmatpush1.bf16.msra.mxu0 0
    %117 = vmatprep.subr.bf16.mxu0 0
    %118 = vmatpush1.bf16.msra.mxu0 0
    %119 = vmatprep.subr.bf16.mxu0 0
    %120 = vmatpush1.bf16.msra.mxu0 0
    %121 = vmatprep.subr.bf16.mxu0 0
    %122 = vmatpush1.bf16.msra.mxu0 0
    %123 = vmatprep.subr.bf16.mxu0 0
    %124 = vmatpush1.bf16.msra.mxu0 0
    %125 = vmatprep.subr.bf16.mxu0 0
    %126 = vmatpush1.bf16.msra.mxu0 0
    %127 = vmatprep.subr.bf16.mxu0 0
    %128 = vmatpush1.bf16.msra.mxu0 0
    %129 = vmatprep.subr.bf16.mxu0 0
    %130 = vmatpush1.bf16.msra.mxu0 0
    %131 = vmatprep.subr.bf16.mxu0 0
    %132 = vmatpush1.bf16.msra.mxu0 0
    %133 = vmatprep.subr.bf16.mxu0 0
    %134 = vmatpush1.bf16.msra.mxu0 0
    %135 = vmatprep.subr.bf16.mxu0 0
    %136 = vmatpush1.bf16.msra.mxu0 0
    %137 = vmatprep.subr.bf16.mxu0 0
    %138 = vmatpush1.bf16.msra.mxu0 0
    %139 = vmatprep.mubr.bf16.mxu0 0
    %140 = vmatmul.mubr.bf16.gmra.mrb[0].mxu0 %v105
    %v141 = vpop.f32.mrb[0].mxu0
    %v142 = vadd.f32 %v93, %v141
    %v143 = vpop.f32.mrb[0].mxu0
    %v144 = vpop.f32.mrb[0].mxu0
    %v145 = vpop.f32.mrb[0].mxu0
    %146 = vdwg.mxu0
    %v147 = vld [vmem:[%s4] sm:$0x1]
    %v149 = vlaneseq
    %v150 = vshrl.u32 %v149, 7
    %v151 = vsub.s32 0, %v150
    %v152 = vrot.slane %v147, %v151
    %v154 = vadd.f32 %v142, %v152
    %v155 = vmul.f32 %v154, 0.01
    %v156 = vmax.f32 %v154, %v155
    %v157 = vpack.c.bf16 %v156, %v156
    %v158 = vld [vmem:[%s5] sm:$0xf]
    %v159 = vld [vmem:[%s5 + $0x4] sm:$0xf]
    %v160 = vld [vmem:[%s5 + $0x8] sm:$0xf]
    %v161 = vld [vmem:[%s5 + $0xc] sm:$0xf]
    %v162 = vld [vmem:[%s6] sm:$0x1]
    %v164 = vlaneseq
    %v165 = vshrl.u32 %v164, 7
    %v166 = vsub.s32 0, %v165
    %v167 = vrot.slane %v162, %v166
    %v173 = vunpack.c.l.b16 %v158
    %v174 = vunpack.c.l.b16 %v159
    %v175 = vunpack.c.l.b16 %v160
    %v176 = vunpack.c.l.b16 %v161
    %v177 = vpack.c.b16 %v174, %v173
    %v178 = vpack.c.b16 %v176, %v175
    %vm181 = vcmask 261120
    %v183 = vsel %vm181, %v157, 0
    %185 = vmatprep.subr.bf16.mxu0 0
    %186 = vmatpush1.bf16.msra.mxu0 %v177
    %187 = vmatprep.subr.bf16.mxu0 0
    %188 = vmatpush1.bf16.msra.mxu0 %v178
    %189 = vmatprep.subr.bf16.mxu0 0
    %190 = vmatpush1.bf16.msra.mxu0 0
    %191 = vmatprep.subr.bf16.mxu0 0
    %192 = vmatpush1.bf16.msra.mxu0 0
    %193 = vmatprep.subr.bf16.mxu0 0
    %194 = vmatpush1.bf16.msra.mxu0 0
    %195 = vmatprep.subr.bf16.mxu0 0
    %196 = vmatpush1.bf16.msra.mxu0 0
    %197 = vmatprep.subr.bf16.mxu0 0
    %198 = vmatpush1.bf16.msra.mxu0 0
    %199 = vmatprep.subr.bf16.mxu0 0
    %200 = vmatpush1.bf16.msra.mxu0 0
    %201 = vmatprep.subr.bf16.mxu0 0
    %202 = vmatpush1.bf16.msra.mxu0 0
    %203 = vmatprep.subr.bf16.mxu0 0
    %204 = vmatpush1.bf16.msra.mxu0 0
    %205 = vmatprep.subr.bf16.mxu0 0
    %206 = vmatpush1.bf16.msra.mxu0 0
    %207 = vmatprep.subr.bf16.mxu0 0
    %208 = vmatpush1.bf16.msra.mxu0 0
    %209 = vmatprep.subr.bf16.mxu0 0
    %210 = vmatpush1.bf16.msra.mxu0 0
    %211 = vmatprep.subr.bf16.mxu0 0
    %212 = vmatpush1.bf16.msra.mxu0 0
    %213 = vmatprep.subr.bf16.mxu0 0
    %214 = vmatpush1.bf16.msra.mxu0 0
    %215 = vmatprep.subr.bf16.mxu0 0
    %216 = vmatpush1.bf16.msra.mxu0 0
    %217 = vmatprep.mubr.bf16.mxu0 0
    %218 = vmatmul.mubr.bf16.gmra.mrb[0].mxu0 %v183
    %v219 = vpop.f32.mrb[0].mxu0
    %v220 = vadd.f32 %v167, %v219
    %v221 = vpop.f32.mrb[0].mxu0
    %v222 = vpop.f32.mrb[0].mxu0
    %v223 = vpop.f32.mrb[0].mxu0
    %224 = vdwg.mxu0
    %vm225 = vcmask 25600
    %226 = vst.msk [vmem:[#allocation5] sm:$0x3] %vm225, %v220
    // Predicated region
    $region34: #{tpu_custom_call.1} parent=1 // pred_check
      _
    $region35: #{tpu_custom_call.1} parent=1 // pred_check_branch
      %228 = sbr.rel (0) target = $region37
    $region36: #{tpu_custom_call.1} parent=1 // pred_region
      %s230 = ssub.s32 32, 32
      %231 = vsyncadd [#allocation4], %s230
      %s233 = sshll.u32 [#allocation5], 4
      %s234 = int_to_ptr.vmem [resolvable:$true] %s233
      %236 = dma.vmem_to_hbm [thread:$0]  %s234, 32, %s7, [#allocation4]
    $region37: #{tpu_custom_call.1} parent=1 // pred_fallthru
      _
    // Predicated region
    $region38: #{tpu_custom_call.1} parent=1 // pred_check
      _
    $region39: #{tpu_custom_call.1} parent=1 // pred_check_branch
      %238 = sbr.rel (0) target = $region41
    $region40: #{tpu_custom_call.1} parent=1 // pred_region
      %239 = dma.done [#allocation4], 32
    $region41: #{tpu_custom_call.1} parent=1 // pred_fallthru
      _
    %240 = vsyncpa [#allocation3], 1
    %241 = vsyncpa [#allocation4], 1

</llo_original>
